<compile_context>
chip_gen: v7x
topology: tpu7x:2x2x1
jax: 0.10.0
libtpu: 0.0.40
codegen_flags: <defaults>
</compile_context>

<pallas_src>
import functools

import jax
import jax.numpy as jnp
from jax.experimental import pallas as pl
from jax.experimental.pallas import tpu as pltpu

F_IN = 2    # input features
H = 10      # hidden units
C = 4       # output classes


def _mlp_kernel(xT_ref, w1T_ref, b1_ref, w2T_ref, b2_ref, oT_ref):
    # xT_ref : (2, TB)  VMEM, lane-dense batch tile
    # w1T_ref: (10, 2)  VMEM (resident)     b1_ref: (10, 1) VMEM (resident)
    # w2T_ref: (4, 10)  VMEM (resident)     b2_ref: (4, 1)  VMEM (resident)
    # oT_ref : (4, TB)  VMEM
    x = xT_ref[...]                                                     # (2, TB)
    h = jnp.dot(w1T_ref[...], x, preferred_element_type=jnp.float32)   # (10, TB) on MXU
    h = jnp.maximum(h + b1_ref[...], 0.0)                              # bias + ReLU on VPU
    o = jnp.dot(w2T_ref[...], h, preferred_element_type=jnp.float32)   # (4, TB) on MXU
    oT_ref[...] = (o + b2_ref[...]).astype(oT_ref.dtype)


def _round_up(n, m):
    return ((n + m - 1) // m) * m


@functools.partial(jax.jit, static_argnames=("block_b",))
def spoof_classifier_forward_fm(xT, w1, b1, w2, b2, *, block_b=65536):
    """Feature-major forward: xT is [2, B] float32 -> [4, B] float32.

    No wrapper-side transposes; only pads the batch axis when it is not
    already a multiple of the chosen tile.  Prefer this entry point when the
    caller can keep data feature-major end-to-end.
    """
    B = xT.shape[1]

    # Lane-aligned batch tile.  Aim for ~B/2 per tile (>=2 grid steps so the
    # "parallel" batch axis spans both v7x TensorCores), capped at block_b and
    # floored at one 128-lane vreg.
    TB = max(128, min(block_b, _round_up(pl.cdiv(B, 2), 128)))
    B_pad = _round_up(B, TB)
    if B_pad != B:
        xT = jnp.pad(xT, ((0, 0), (0, B_pad - B)))                      # (2, B_pad)

    # Weights pre-transposed for the MXU; biases as broadcastable columns.
    w1T = jnp.transpose(w1)                                             # (10, 2)
    w2T = jnp.transpose(w2)                                             # (4, 10)
    b1c = b1.reshape(H, 1)                                              # (10, 1)
    b2c = b2.reshape(C, 1)                                              # (4, 1)

    grid = (B_pad // TB,)
    resident = lambda shape: pl.BlockSpec(shape, lambda i: (0, 0))      # DMA'd once, stays in VMEM

    cost = pl.CostEstimate(
        flops=2 * B_pad * (F_IN * H + H * C),
        transcendentals=0,
        bytes_accessed=4 * (F_IN + C) * B_pad + 4 * (F_IN * H + H + H * C + C),
    )

    outT = pl.pallas_call(
        _mlp_kernel,
        out_shape=jax.ShapeDtypeStruct((C, B_pad), jnp.float32),
        grid=grid,
        in_specs=[
            pl.BlockSpec((F_IN, TB), lambda i: (0, i)),                 # x tile, lane-dense
            resident((H, F_IN)),                                        # w1T
            resident((H, 1)),                                           # b1 column
            resident((C, H)),                                           # w2T
            resident((C, 1)),                                           # b2 column
        ],
        out_specs=pl.BlockSpec((C, TB), lambda i: (0, i)),              # out tile, lane-dense
        compiler_params=pltpu.CompilerParams(
            dimension_semantics=("parallel",),                          # batch tiles across v7x's 2 TCs
            vmem_limit_bytes=48 * 1024 * 1024,                          # headroom for TB up to 64K on v5e
        ),
        cost_estimate=cost,
    )(xT, w1T, b1c, w2T, b2c)

    return outT[:, :B]                                                  # (4, B)


def spoof_classifier_forward(x, w1, b1, w2, b2, *, block_b=65536):
    """Batch-major API matching torch SpoofClassifier.forward: [B,2] -> [B,4].

    w1: [2, 10], b1: [10], w2: [10, 4], b2: [4]  (w = torch_weight.T).
    """
    xT = jnp.transpose(x)                                               # (2, B)
    outT = spoof_classifier_forward_fm(xT, w1, b1, w2, b2, block_b=block_b)
    return jnp.transpose(outT)                                          # (B, 4)


def init_params(key):
    """Deterministic init mimicking nn.Linear default (uniform +/- 1/sqrt(fan_in))."""
    k1, k2, k3, k4 = jax.random.split(key, 4)
    bound1 = 1.0 / jnp.sqrt(2.0)    # fc1: in_features=2
    bound2 = 1.0 / jnp.sqrt(10.0)   # fc2: in_features=10
    w1 = jax.random.uniform(k1, (F_IN, H), jnp.float32, -bound1, bound1)
    b1 = jax.random.uniform(k2, (H,), jnp.float32, -bound1, bound1)
    w2 = jax.random.uniform(k3, (H, C), jnp.float32, -bound2, bound2)
    b2 = jax.random.uniform(k4, (C,), jnp.float32, -bound2, bound2)
    return w1, b1, w2, b2


if __name__ == "__main__":
    key = jax.random.PRNGKey(0)
    kx, kp = jax.random.split(key)

    B = 8
    x = jax.random.normal(kx, (B, F_IN), dtype=jnp.float32)
    w1, b1, w2, b2 = init_params(kp)

    out = spoof_classifier_forward(x, w1, b1, w2, b2)
    out = jax.block_until_ready(out)

    # Reference check in plain JAX (same math as the PyTorch forward).
    ref = jnp.maximum(x @ w1 + b1, 0.0) @ w2 + b2
    assert out.shape == (B, C)
    assert jnp.allclose(out, ref, atol=1e-5, rtol=1e-5)

    # Also exercise a multi-tile, non-aligned batch to cover the padded path.
    B2 = 300
    x2 = jax.random.normal(kx, (B2, F_IN), dtype=jnp.float32)
    out2 = jax.block_until_ready(spoof_classifier_forward(x2, w1, b1, w2, b2))
    ref2 = jnp.maximum(x2 @ w1 + b1, 0.0) @ w2 + b2
    assert out2.shape == (B2, C)
    assert jnp.allclose(out2, ref2, atol=1e-5, rtol=1e-5)

    print("KERNEL_OK")
</pallas_src>

<mosaic_0001>
module attributes {stable_mosaic.version = 11 : i64} {
  func.func @_mlp_kernel(%arg0: i32, %arg1: memref<2x128xf32, #tpu.memory_space<vmem>>, %arg2: memref<10x2xf32, #tpu.memory_space<vmem>>, %arg3: memref<10x1xf32, #tpu.memory_space<vmem>>, %arg4: memref<4x10xf32, #tpu.memory_space<vmem>>, %arg5: memref<4x1xf32, #tpu.memory_space<vmem>>, %arg6: memref<4x128xf32, #tpu.memory_space<vmem>>) attributes {dimension_semantics = [#tpu.dimension_semantics<parallel>], iteration_bounds = array<i64: 1>, scalar_prefetch = 0 : i64, scratch_operands = 0 : i64, tpu.core_type = #tpu.core_type<tc>, window_params = [{transform_indices = @transform_0, window_bounds = array<i64: 2, 128>}, {pipeline_mode = #tpu.pipeline_mode<synchronous>, transform_indices = @transform_1, window_bounds = array<i64: 10, 2>}, {pipeline_mode = #tpu.pipeline_mode<synchronous>, transform_indices = @transform_2, window_bounds = array<i64: 10, 1>}, {pipeline_mode = #tpu.pipeline_mode<synchronous>, transform_indices = @transform_3, window_bounds = array<i64: 4, 10>}, {pipeline_mode = #tpu.pipeline_mode<synchronous>, transform_indices = @transform_4, window_bounds = array<i64: 4, 1>}, {transform_indices = @transform_5, window_bounds = array<i64: 4, 128>}]} {
    %c0 = arith.constant 0 : index
    %c0_0 = arith.constant 0 : index
    %0 = vector.load %arg1[%c0, %c0_0] : memref<2x128xf32, #tpu.memory_space<vmem>>, vector<2x128xf32>
    %c0_1 = arith.constant 0 : index
    %c0_2 = arith.constant 0 : index
    %1 = vector.load %arg2[%c0_1, %c0_2] : memref<10x2xf32, #tpu.memory_space<vmem>>, vector<10x2xf32>
    %cst = arith.constant dense<0.000000e+00> : vector<10x128xf32>
    %2 = tpu.matmul %1, %0, %cst {dimension_numbers = #tpu.dot_dimension_numbers<[1], [0], [0], [1], [0, 0, 1, 1], [], []>} : vector<10x2xf32>, vector<2x128xf32>, vector<10x128xf32> -> vector<10x128xf32>
    %c0_3 = arith.constant 0 : index
    %c0_4 = arith.constant 0 : index
    %3 = vector.load %arg3[%c0_3, %c0_4] : memref<10x1xf32, #tpu.memory_space<vmem>>, vector<10x1xf32>
    %4 = vector.broadcast %3 : vector<10x1xf32> to vector<10x128xf32>
    %5 = arith.addf %2, %4 : vector<10x128xf32>
    %cst_5 = arith.constant 0.000000e+00 : f32
    %6 = vector.broadcast %cst_5 : f32 to vector<10x128xf32>
    %7 = arith.maximumf %5, %6 : vector<10x128xf32>
    %c0_6 = arith.constant 0 : index
    %c0_7 = arith.constant 0 : index
    %8 = vector.load %arg4[%c0_6, %c0_7] : memref<4x10xf32, #tpu.memory_space<vmem>>, vector<4x10xf32>
    %cst_8 = arith.constant dense<0.000000e+00> : vector<4x128xf32>
    %9 = tpu.matmul %8, %7, %cst_8 {dimension_numbers = #tpu.dot_dimension_numbers<[1], [0], [0], [1], [0, 0, 1, 1], [], []>} : vector<4x10xf32>, vector<10x128xf32>, vector<4x128xf32> -> vector<4x128xf32>
    %c0_9 = arith.constant 0 : index
    %c0_10 = arith.constant 0 : index
    %10 = vector.load %arg5[%c0_9, %c0_10] : memref<4x1xf32, #tpu.memory_space<vmem>>, vector<4x1xf32>
    %11 = vector.broadcast %10 : vector<4x1xf32> to vector<4x128xf32>
    %12 = arith.addf %9, %11 : vector<4x128xf32>
    %c0_11 = arith.constant 0 : index
    %c0_12 = arith.constant 0 : index
    %13 = vector.load %arg6[%c0_11, %c0_12] : memref<4x128xf32, #tpu.memory_space<vmem>>, vector<4x128xf32>
    tpu.vector_store %arg6[%c0_11, %c0_12], %12 {strides = array<i32>} : memref<4x128xf32, #tpu.memory_space<vmem>>, vector<4x128xf32>,
    return
  }
  func.func @transform_0(%arg0: i32) -> (i32, i32) {
    %c0_i32 = arith.constant 0 : i32
    %c0_i32_0 = arith.constant 0 : i32
    return %c0_i32, %arg0 : i32, i32
  }
  func.func @transform_1(%arg0: i32) -> (i32, i32) {
    %c0_i32 = arith.constant 0 : i32
    %c0_i32_0 = arith.constant 0 : i32
    %c0_i32_1 = arith.constant 0 : i32
    return %c0_i32, %c0_i32_0 : i32, i32
  }
  func.func @transform_2(%arg0: i32) -> (i32, i32) {
    %c0_i32 = arith.constant 0 : i32
    %c0_i32_0 = arith.constant 0 : i32
    %c0_i32_1 = arith.constant 0 : i32
    return %c0_i32, %c0_i32_0 : i32, i32
  }
  func.func @transform_3(%arg0: i32) -> (i32, i32) {
    %c0_i32 = arith.constant 0 : i32
    %c0_i32_0 = arith.constant 0 : i32
    %c0_i32_1 = arith.constant 0 : i32
    return %c0_i32, %c0_i32_0 : i32, i32
  }
  func.func @transform_4(%arg0: i32) -> (i32, i32) {
    %c0_i32 = arith.constant 0 : i32
    %c0_i32_0 = arith.constant 0 : i32
    %c0_i32_1 = arith.constant 0 : i32
    return %c0_i32, %c0_i32_0 : i32, i32
  }
  func.func @transform_5(%arg0: i32) -> (i32, i32) {
    %c0_i32 = arith.constant 0 : i32
    %c0_i32_0 = arith.constant 0 : i32
    return %c0_i32, %arg0 : i32, i32
  }
}

</mosaic_0001>

<llo_original>
// kernel: spoof_classifier_forward_fm.1
$region0: #{spoof_classifier_forward_fm.1}
  #allocation0 [shape = 'u32[]', space=smem, size = 0x4, offset = 0x4, fixed_abs, tag = 'smem constant byte address 0x4 - core index']
  #allocation1 [shape = 'u32[144,128]{1,0:T(1,128)}', space=vmem, size = 0x12000, scoped, tag = 'internal scratch']
  %s0 = inlined_call_operand.vmem [shape: f32[2,128], index: 0, kind: input, shape index: {}]
  %s1 = inlined_call_operand.vmem [shape: f32[10,2], index: 1, kind: input, shape index: {}]
  %s2 = inlined_call_operand.vmem [shape: f32[10,1], index: 2, kind: input, shape index: {}]
  %s3 = inlined_call_operand.vmem [shape: f32[4,10], index: 3, kind: input, shape index: {}]
  %s4 = inlined_call_operand.vmem [shape: f32[4,1], index: 4, kind: input, shape index: {}]
  %s5 = inlined_call_operand.hbm [shape: f32[4,128], index: 5, kind: output, shape index: {}]
  %s6 = sld [smem:[#allocation0]]
  $region30: #{spoof_classifier_forward_fm.1} parent=0
    _
  %s8 = ssub.s32 1, %s6
  %s9 = scalar_select 0, %s8, %s6
  $region1: #{spoof_classifier_forward_fm.1} parent=0
    #allocation2 [shape = 'u8[2048]{0}', space=vmem, size = 0x800, scoped, tag = 'output window, operand 0, single buffered']
    #allocation3 [shape = 's32[1]{0}', space=sflag, size = 0x4, scoped, tag = 'scoped memory for spoof_classifier_forward_fm.1']
    %10 = vsyncpa [#allocation3], 0
    // Predicated region
    $region2: #{spoof_classifier_forward_fm.1} parent=1 // pred_check
      _
    $region3: #{spoof_classifier_forward_fm.1} parent=1 // pred_check_branch
      %12 = sbr.rel (0) target = $region5
    $region4: #{spoof_classifier_forward_fm.1} parent=1 // pred_region
      _
    $region5: #{spoof_classifier_forward_fm.1} parent=1 // pred_fallthru
      _
    // Predicated region
    $region6: #{spoof_classifier_forward_fm.1} parent=1 // pred_check
      _
    $region7: #{spoof_classifier_forward_fm.1} parent=1 // pred_check_branch
      %14 = sbr.rel (0) target = $region9
    $region8: #{spoof_classifier_forward_fm.1} parent=1 // pred_region
      _
    $region9: #{spoof_classifier_forward_fm.1} parent=1 // pred_fallthru
      _
    // Predicated region
    $region10: #{spoof_classifier_forward_fm.1} parent=1 // pred_check
      _
    $region11: #{spoof_classifier_forward_fm.1} parent=1 // pred_check_branch
      %16 = sbr.rel (0) target = $region13
    $region12: #{spoof_classifier_forward_fm.1} parent=1 // pred_region
      _
    $region13: #{spoof_classifier_forward_fm.1} parent=1 // pred_fallthru
      _
    // Predicated region
    $region14: #{spoof_classifier_forward_fm.1} parent=1 // pred_check
      _
    $region15: #{spoof_classifier_forward_fm.1} parent=1 // pred_check_branch
      %18 = sbr.rel (0) target = $region17
    $region16: #{spoof_classifier_forward_fm.1} parent=1 // pred_region
      _
    $region17: #{spoof_classifier_forward_fm.1} parent=1 // pred_fallthru
      _
    // Predicated region
    $region18: #{spoof_classifier_forward_fm.1} parent=1 // pred_check
      _
    $region19: #{spoof_classifier_forward_fm.1} parent=1 // pred_check_branch
      %20 = sbr.rel (0) target = $region21
    $region20: #{spoof_classifier_forward_fm.1} parent=1 // pred_region
      _
    $region21: #{spoof_classifier_forward_fm.1} parent=1 // pred_fallthru
      _
    %v21 = vld [vmem:[%s0] sm:$0x3]
    %v22 = vld [vmem:[%s1] sm:$0xff]
    %v23 = vld [vmem:[%s1 + $0x8] sm:$0x3]
    %v24 = vld [vmem:[%s2] sm:$0xff]
    %v25 = vld [vmem:[%s2 + $0x8] sm:$0x3]
    %27 = vset.pattern.permute.xlu0 0
    %28 = vperm.xlu0 %27, %v24
    %v29 = vpop.permute.xlu0 %28
    %32 = vset.pattern.permute.xlu0 0
    %33 = vperm.xlu0 %32, %v25
    %v34 = vpop.permute.xlu0 %33
    %vm36 = vcmask 15360
    %v38 = vsel %vm36, %v22, 0
    %v41 = vsel %vm36, %v23, 0
    %vm43 = vcmask 1041408
    %v45 = vsel %vm43, %v21, 0
    %47 = vmatprep.subr.mxu0 0.0
    %48 = vmatpush1.msra.mxu0 %v45
    %49 = vmatprep.subr.mxu0 0.0
    %50 = vmatpush1.msra.mxu0 0.0
    %51 = vmatprep.subr.mxu0 0.0
    %52 = vmatpush1.msra.mxu0 0.0
    %53 = vmatprep.subr.mxu0 0.0
    %54 = vmatpush1.msra.mxu0 0.0
    %55 = vmatprep.subr.mxu0 0.0
    %56 = vmatpush1.msra.mxu0 0.0
    %57 = vmatprep.subr.mxu0 0.0
    %58 = vmatpush1.msra.mxu0 0.0
    %59 = vmatprep.subr.mxu0 0.0
    %60 = vmatpush1.msra.mxu0 0.0
    %61 = vmatprep.subr.mxu0 0.0
    %62 = vmatpush1.msra.mxu0 0.0
    %63 = vmatprep.subr.mxu0 0.0
    %64 = vmatpush1.msra.mxu0 0.0
    %65 = vmatprep.subr.mxu0 0.0
    %66 = vmatpush1.msra.mxu0 0.0
    %67 = vmatprep.subr.mxu0 0.0
    %68 = vmatpush1.msra.mxu0 0.0
    %69 = vmatprep.subr.mxu0 0.0
    %70 = vmatpush1.msra.mxu0 0.0
    %71 = vmatprep.subr.mxu0 0.0
    %72 = vmatpush1.msra.mxu0 0.0
    %73 = vmatprep.subr.mxu0 0.0
    %74 = vmatpush1.msra.mxu0 0.0
    %75 = vmatprep.subr.mxu0 0.0
    %76 = vmatpush1.msra.mxu0 0.0
    %77 = vmatprep.subr.mxu0 0.0
    %78 = vmatpush1.msra.mxu0 0.0
    %79 = vmatprep.subr.mxu0 0.0
    %80 = vmatpush1.msra.mxu0 0.0
    %81 = vmatprep.subr.mxu0 0.0
    %82 = vmatpush1.msra.mxu0 0.0
    %83 = vmatprep.subr.mxu0 0.0
    %84 = vmatpush1.msra.mxu0 0.0
    %85 = vmatprep.subr.mxu0 0.0
    %86 = vmatpush1.msra.mxu0 0.0
    %87 = vmatprep.subr.mxu0 0.0
    %88 = vmatpush1.msra.mxu0 0.0
    %89 = vmatprep.subr.mxu0 0.0
    %90 = vmatpush1.msra.mxu0 0.0
    %91 = vmatprep.subr.mxu0 0.0
    %92 = vmatpush1.msra.mxu0 0.0
    %93 = vmatprep.subr.mxu0 0.0
    %94 = vmatpush1.msra.mxu0 0.0
    %95 = vmatprep.subr.mxu0 0.0
    %96 = vmatpush1.msra.mxu0 0.0
    %97 = vmatprep.subr.mxu0 0.0
    %98 = vmatpush1.msra.mxu0 0.0
    %99 = vmatprep.subr.mxu0 0.0
    %100 = vmatpush1.msra.mxu0 0.0
    %101 = vmatprep.subr.mxu0 0.0
    %102 = vmatpush1.msra.mxu0 0.0
    %103 = vmatprep.subr.mxu0 0.0
    %104 = vmatpush1.msra.mxu0 0.0
    %105 = vmatprep.subr.mxu0 0.0
    %106 = vmatpush1.msra.mxu0 0.0
    %107 = vmatprep.subr.mxu0 0.0
    %108 = vmatpush1.msra.mxu0 0.0
    %109 = vmatprep.subr.mxu0 0.0
    %110 = vmatpush1.msra.mxu0 0.0
    %111 = vmatprep.mubr.f32.mxu0 0.0
    %112 = vmatmul.mubr.f32.gmra.mrb[0].mxu0 %v38
    %v113 = vpop.f32.mrb[0].mxu0
    %v114 = vadd.f32 %v29, %v113
    %v115 = vpop.f32.mrb[0].mxu0
    %116 = vmatprep.mubr.f32.mxu0 0.0
    %117 = vmatmul.mubr.f32.gmra.mrb[0].mxu0 %v41
    %v118 = vpop.f32.mrb[0].mxu0
    %v119 = vadd.f32 %v34, %v118
    %v120 = vpop.f32.mrb[0].mxu0
    %121 = vdwg.mxu0
    %v122 = vmax.f32 %v114, 0.0
    %v123 = vmax.f32 %v119, 0.0
    %v124 = vld [vmem:[%s3] sm:$0xf]
    %v125 = vld [vmem:[%s4] sm:$0xf]
    %127 = vset.pattern.permute.xlu0 0
    %128 = vperm.xlu0 %127, %v125
    %v129 = vpop.permute.xlu0 %128
    %vm131 = vcmask 80896
    %v133 = vsel %vm131, %v124, 0
    %v136 = vsel %vm43, %v123, 0
    %138 = vmatprep.subr.mxu0 0.0
    %139 = vmatpush1.msra.mxu0 %v122
    %140 = vmatprep.subr.mxu0 0.0
    %141 = vmatpush1.msra.mxu0 %v136
    %142 = vmatprep.subr.mxu0 0.0
    %143 = vmatpush1.msra.mxu0 0.0
    %144 = vmatprep.subr.mxu0 0.0
    %145 = vmatpush1.msra.mxu0 0.0
    %146 = vmatprep.subr.mxu0 0.0
    %147 = vmatpush1.msra.mxu0 0.0
    %148 = vmatprep.subr.mxu0 0.0
    %149 = vmatpush1.msra.mxu0 0.0
    %150 = vmatprep.subr.mxu0 0.0
    %151 = vmatpush1.msra.mxu0 0.0
    %152 = vmatprep.subr.mxu0 0.0
    %153 = vmatpush1.msra.mxu0 0.0
    %154 = vmatprep.subr.mxu0 0.0
    %155 = vmatpush1.msra.mxu0 0.0
    %156 = vmatprep.subr.mxu0 0.0
    %157 = vmatpush1.msra.mxu0 0.0
    %158 = vmatprep.subr.mxu0 0.0
    %159 = vmatpush1.msra.mxu0 0.0
    %160 = vmatprep.subr.mxu0 0.0
    %161 = vmatpush1.msra.mxu0 0.0
    %162 = vmatprep.subr.mxu0 0.0
    %163 = vmatpush1.msra.mxu0 0.0
    %164 = vmatprep.subr.mxu0 0.0
    %165 = vmatpush1.msra.mxu0 0.0
    %166 = vmatprep.subr.mxu0 0.0
    %167 = vmatpush1.msra.mxu0 0.0
    %168 = vmatprep.subr.mxu0 0.0
    %169 = vmatpush1.msra.mxu0 0.0
    %170 = vmatprep.subr.mxu0 0.0
    %171 = vmatpush1.msra.mxu0 0.0
    %172 = vmatprep.subr.mxu0 0.0
    %173 = vmatpush1.msra.mxu0 0.0
    %174 = vmatprep.subr.mxu0 0.0
    %175 = vmatpush1.msra.mxu0 0.0
    %176 = vmatprep.subr.mxu0 0.0
    %177 = vmatpush1.msra.mxu0 0.0
    %178 = vmatprep.subr.mxu0 0.0
    %179 = vmatpush1.msra.mxu0 0.0
    %180 = vmatprep.subr.mxu0 0.0
    %181 = vmatpush1.msra.mxu0 0.0
    %182 = vmatprep.subr.mxu0 0.0
    %183 = vmatpush1.msra.mxu0 0.0
    %184 = vmatprep.subr.mxu0 0.0
    %185 = vmatpush1.msra.mxu0 0.0
    %186 = vmatprep.subr.mxu0 0.0
    %187 = vmatpush1.msra.mxu0 0.0
    %188 = vmatprep.subr.mxu0 0.0
    %189 = vmatpush1.msra.mxu0 0.0
    %190 = vmatprep.subr.mxu0 0.0
    %191 = vmatpush1.msra.mxu0 0.0
    %192 = vmatprep.subr.mxu0 0.0
    %193 = vmatpush1.msra.mxu0 0.0
    %194 = vmatprep.subr.mxu0 0.0
    %195 = vmatpush1.msra.mxu0 0.0
    %196 = vmatprep.subr.mxu0 0.0
    %197 = vmatpush1.msra.mxu0 0.0
    %198 = vmatprep.subr.mxu0 0.0
    %199 = vmatpush1.msra.mxu0 0.0
    %200 = vmatprep.subr.mxu0 0.0
    %201 = vmatpush1.msra.mxu0 0.0
    %202 = vmatprep.mubr.f32.mxu0 0.0
    %203 = vmatmul.mubr.f32.gmra.mrb[0].mxu0 %v133
    %v204 = vpop.f32.mrb[0].mxu0
    %v205 = vadd.f32 %v129, %v204
    %v206 = vpop.f32.mrb[0].mxu0
    %207 = vdwg.mxu0
    %208 = vst [vmem:[#allocation2] sm:$0xf] %v205
    // Predicated region
    $region22: #{spoof_classifier_forward_fm.1} parent=1 // pred_check
      _
    $region23: #{spoof_classifier_forward_fm.1} parent=1 // pred_check_branch
      %210 = sbr.rel (0) target = $region25
    $region24: #{spoof_classifier_forward_fm.1} parent=1 // pred_region
      %s212 = ssub.s32 64, 64
      %213 = vsyncadd [#allocation3], %s212
      %s215 = sshll.u32 [#allocation2], 4
      %s216 = int_to_ptr.vmem [resolvable:$true] %s215
      %218 = dma.vmem_to_hbm [thread:$0]  %s216, 64, %s5, [#allocation3]
    $region25: #{spoof_classifier_forward_fm.1} parent=1 // pred_fallthru
      _
    // Predicated region
    $region26: #{spoof_classifier_forward_fm.1} parent=1 // pred_check
      _
    $region27: #{spoof_classifier_forward_fm.1} parent=1 // pred_check_branch
      %220 = sbr.rel (0) target = $region29
    $region28: #{spoof_classifier_forward_fm.1} parent=1 // pred_region
      %221 = dma.done [#allocation3], 64
    $region29: #{spoof_classifier_forward_fm.1} parent=1 // pred_fallthru
      _
    %222 = vsyncpa [#allocation3], 1

</llo_original>
